<compile_context>
chip_gen: v7x
topology: tpu7x:2x2x1
jax: 0.10.0
libtpu: 0.0.40
codegen_flags: <defaults>
</compile_context>

<pallas_src>
import functools

import jax
import jax.numpy as jnp
from jax.experimental import pallas as pl
from jax.experimental.pallas import tpu as pltpu

_MiB = 1024 * 1024


def _round_up(x, m):
    return ((x + m - 1) // m) * m


def _phi3_mlp_kernel(x_ref, wgu_ref, wd_ref, o_ref, acc_ref, *, epilogue_dtype):
    # x_ref:   (tm, H)      compute dtype (bf16)
    # wgu_ref: (H, 2*ti)    K-major packed [gate_j | up_j] weight tile
    # wd_ref:  (ti, H)      K-major down-projection weight tile
    # o_ref:   (tm, H)      output (resident across the I axis)
    # acc_ref: (tm, H)      persistent f32 accumulator scratch
    j = pl.program_id(1)

    @pl.when(j == 0)
    def _():
        acc_ref[...] = jnp.zeros_like(acc_ref)

    ti = wd_ref.shape[0]
    x = x_ref[...]                                                     # (tm, H)

    # One fused gate|up matmul (plain NN on the MXU, f32 accumulation).
    gu = jnp.dot(x, wgu_ref[...], preferred_element_type=jnp.float32)  # (tm, 2*ti)
    gate = gu[:, :ti]
    up = gu[:, ti:]

    # silu(gate) = gate * sigmoid(gate); exp and the approximate reciprocal
    # both run on the EUP slot, leaving the VALU free for the accumulate.
    sig = pl.reciprocal(1.0 + jnp.exp(-gate), approx=True)             # f32
    h = (up.astype(epilogue_dtype)
         * (gate * sig).astype(epilogue_dtype)).astype(wd_ref.dtype)   # (tm, ti)

    acc_ref[...] += jnp.dot(h, wd_ref[...],
                            preferred_element_type=jnp.float32)        # (tm, H)

    @pl.when(j == pl.num_programs(1) - 1)
    def _():
        o_ref[...] = acc_ref[...].astype(o_ref.dtype)


def _chip_config():
    """Generation-aware defaults: (tm, VMEM budget, min row tiles, bf16 VPU)."""
    kind = ""
    try:
        kind = jax.devices()[0].device_kind.lower()
    except Exception:
        pass

    try:
        vmem_phys = int(pltpu.get_tpu_info().vmem_capacity_bytes)
    except Exception:
        vmem_phys = None

    if "v5" in kind:
        tm_default, phys_fallback, min_row_tiles, bf16_vpu = 256, 128 * _MiB, 1, False
    elif "v6" in kind:
        tm_default, phys_fallback, min_row_tiles, bf16_vpu = 1024, 128 * _MiB, 1, True
    elif "7" in kind:
        tm_default, phys_fallback, min_row_tiles, bf16_vpu = 512, 64 * _MiB, 2, True
    else:  # unknown generation: conservative
        tm_default, phys_fallback, min_row_tiles, bf16_vpu = 512, 64 * _MiB, 1, False

    if vmem_phys is None:
        vmem_phys = phys_fallback
    vmem_budget = int(0.80 * vmem_phys)  # leave headroom for Mosaic scratch
    return tm_default, vmem_budget, min_row_tiles, bf16_vpu


def phi3_mlp(hidden_states, w_gate_up, w_down, *, tm=None, ti=512,
             compute_dtype=jnp.bfloat16):
    """Phi3MLP forward: down_proj( up * silu(gate) ).

    hidden_states: [B, S, H]
    w_gate_up:     [2*I, H]  (nn.Linear [out, in]; rows [:I] gate, [I:] up)
    w_down:        [H, I]    (nn.Linear [out, in])

    For production, pre-pack / pre-transpose + cast the weights once outside
    the call path; the one-time HBM reshuffle below is then amortized away.
    """
    B, S, H = hidden_states.shape
    two_I, H2 = w_gate_up.shape
    I = two_I // 2
    assert H2 == H and w_down.shape == (H, I)
    assert H % 128 == 0 and I % 128 == 0, "Phi3 dims must be lane-aligned"

    out_dtype = hidden_states.dtype
    M = B * S

    tm_default, vmem_budget, min_row_tiles, bf16_vpu = _chip_config()
    epilogue_dtype = (compute_dtype
                      if (bf16_vpu and compute_dtype == jnp.bfloat16)
                      else jnp.float32)

    # --- tile selection -----------------------------------------------------
    ti = min(ti, I)
    while I % ti:                        # keep ti a lane-aligned divisor of I
        ti -= 128

    if tm is None:
        tm = tm_default
    m_pad16 = _round_up(max(M, 1), 16)   # bf16 packs two rows per sublane
    tm = min(_round_up(tm, 16), m_pad16)
    if min_row_tiles > 1 and M > 16:
        # v7x megacore: keep >= 2 row tiles so both TensorCores get work.
        tm = min(tm, _round_up(pl.cdiv(M, min_row_tiles), 16))
    # TODO(synk): for v7x decode (M <= 16) split the I reduction across the two
    # TensorCores (pl.core_map + shared partial accumulators) instead.

    bs = jnp.dtype(compute_dtype).itemsize
    osz = jnp.dtype(out_dtype).itemsize

    def vmem_need(tm_, ti_):
        return (2 * tm_ * H * bs             # x row tile (double-buffered)
                + 2 * H * (2 * ti_) * bs     # packed gate|up weight tile
                + 2 * ti_ * H * bs           # down weight tile
                + tm_ * H * 4                # f32 accumulator scratch
                + 2 * tm_ * H * osz)         # output tile

    headroom = 1.25
    while vmem_need(tm, ti) * headroom > vmem_budget:
        if tm > 256:
            tm = max(256, tm - 128)
        elif ti > 128:
            ti -= 128
            while I % ti:
                ti -= 128
        else:
            break

    M_pad = pl.cdiv(M, tm) * tm
    n_ti = I // ti
    grid = (M_pad // tm, n_ti)

    # --- operands -------------------------------------------------------------
    x2d = hidden_states.reshape(M, H).astype(compute_dtype)
    if M_pad != M:
        x2d = jnp.pad(x2d, ((0, M_pad - M), (0, 0)))

    # One-time HBM reshuffle: K-major weights, gate/up packed per I-tile so each
    # grid step fetches one contiguous (H, 2*ti) slab and runs one NN matmul.
    wg = w_gate_up[:I].reshape(n_ti, ti, H)
    wu = w_gate_up[I:].reshape(n_ti, ti, H)
    w_gu_k = (jnp.concatenate([wg, wu], axis=1)      # (n_ti, 2*ti, H)
              .reshape(2 * I, H).T                   # (H, 2*I), packed per tile
              .astype(compute_dtype))
    w_dn_k = w_down.T.astype(compute_dtype)          # (I, H) K-major

    vmem_limit = int(min(vmem_budget,
                         max(32 * _MiB, vmem_need(tm, ti) * headroom)))

    cost = pl.CostEstimate(
        flops=6 * M_pad * I * H,
        transcendentals=M_pad * I,
        bytes_accessed=(M_pad * H * (bs + osz)
                        + (M_pad // tm) * 3 * I * H * bs),
    )

    kernel = functools.partial(_phi3_mlp_kernel, epilogue_dtype=epilogue_dtype)

    out2d = pl.pallas_call(
        kernel,
        out_shape=jax.ShapeDtypeStruct((M_pad, H), out_dtype),
        grid_spec=pltpu.PrefetchScalarGridSpec(
            num_scalar_prefetch=0,
            grid=grid,
            in_specs=[
                pl.BlockSpec((tm, H), lambda i, j: (i, 0)),       # x rows
                pl.BlockSpec((H, 2 * ti), lambda i, j: (0, j)),   # gate|up slab
                pl.BlockSpec((ti, H), lambda i, j: (j, 0)),       # down tile
            ],
            out_specs=pl.BlockSpec((tm, H), lambda i, j: (i, 0)),
            scratch_shapes=[pltpu.VMEM((tm, H), jnp.float32)],
        ),
        compiler_params=pltpu.CompilerParams(
            dimension_semantics=("parallel", "arbitrary"),
            vmem_limit_bytes=vmem_limit,
        ),
        cost_estimate=cost,
    )(x2d, w_gu_k, w_dn_k)

    return out2d[:M].reshape(B, S, H)


def _reference(hidden_states, w_gate_up, w_down):
    # Pure-JAX f32 reference matching the PyTorch forward exactly.
    gu = jnp.einsum("bsh,oh->bso", hidden_states, w_gate_up)
    I = w_gate_up.shape[0] // 2
    gate, up = gu[..., :I], gu[..., I:]
    h = up * (gate * jax.nn.sigmoid(gate))
    return jnp.einsum("bsi,hi->bsh", h, w_down)


if __name__ == "__main__":
    # Small, lane-aligned shapes (Phi3 itself uses H=3072, I=8192).
    batch, seq, hidden, intermediate = 2, 8, 128, 256

    key = jax.random.PRNGKey(0)
    kx, kgu, kdn = jax.random.split(key, 3)
    x = jax.random.normal(kx, (batch, seq, hidden), dtype=jnp.float32)
    # Synthetic weights in PyTorch nn.Linear layout [out, in].
    w_gate_up = jax.random.normal(
        kgu, (2 * intermediate, hidden), dtype=jnp.float32) * 0.05
    w_down = jax.random.normal(
        kdn, (hidden, intermediate), dtype=jnp.float32) * 0.05

    out = phi3_mlp(x, w_gate_up, w_down)
    out = jax.block_until_ready(out)

    # Reference in f32 on bf16-quantized operands (the kernel's MXU inputs are
    # bf16 with f32 accumulation), so the comparison isolates kernel errors.
    xq = x.astype(jnp.bfloat16).astype(jnp.float32)
    wguq = w_gate_up.astype(jnp.bfloat16).astype(jnp.float32)
    wdnq = w_down.astype(jnp.bfloat16).astype(jnp.float32)
    ref = _reference(xq, wguq, wdnq)

    assert out.shape == (batch, seq, hidden)
    assert out.dtype == x.dtype
    assert jnp.allclose(out, ref, atol=5e-3, rtol=5e-2), "mismatch vs reference"

    print("KERNEL_OK")
</pallas_src>

<mosaic_0001>
module attributes {stable_mosaic.version = 11 : i64} {
  func.func @_phi3_mlp_kernel(%arg0: i32, %arg1: i32, %arg2: memref<16x128xbf16, #tpu.memory_space<vmem>>, %arg3: memref<128x512xbf16, #tpu.memory_space<vmem>>, %arg4: memref<256x128xbf16, #tpu.memory_space<vmem>>, %arg5: memref<16x128xf32, #tpu.memory_space<vmem>>, %arg6: memref<16x128xf32, #tpu.memory_space<vmem>>) attributes {dimension_semantics = [#tpu.dimension_semantics<parallel>, #tpu.dimension_semantics<arbitrary>], iteration_bounds = array<i64: 1, 1>, scalar_prefetch = 0 : i64, scratch_operands = 1 : i64, tpu.core_type = #tpu.core_type<tc>, window_params = [{transform_indices = @transform_0, window_bounds = array<i64: 16, 128>}, {transform_indices = @transform_1, window_bounds = array<i64: 128, 512>}, {transform_indices = @transform_2, window_bounds = array<i64: 256, 128>}, {transform_indices = @transform_3, window_bounds = array<i64: 16, 128>}]} {
    %c0_i32 = arith.constant 0 : i32
    %0 = arith.cmpi eq, %arg1, %c0_i32 : i32
    %1 = arith.extui %0 : i1 to i32
    %c0_i32_0 = arith.constant 0 : i32
    %2 = arith.cmpi ne, %1, %c0_i32_0 : i32
    scf.if %2 {
      %cst_15 = arith.constant 0.000000e+00 : f32
      %25 = vector.broadcast %cst_15 : f32 to vector<16x128xf32>
      %c0_16 = arith.constant 0 : index
      %c0_17 = arith.constant 0 : index
      %26 = vector.load %arg6[%c0_16, %c0_17] : memref<16x128xf32, #tpu.memory_space<vmem>>, vector<16x128xf32>
      tpu.vector_store %arg6[%c0_16, %c0_17], %25 {strides = array<i32>} : memref<16x128xf32, #tpu.memory_space<vmem>>, vector<16x128xf32>,
    } else {
    }
    %c0 = arith.constant 0 : index
    %c0_1 = arith.constant 0 : index
    %3 = vector.load %arg2[%c0, %c0_1] : memref<16x128xbf16, #tpu.memory_space<vmem>>, vector<16x128xbf16>
    %c0_2 = arith.constant 0 : index
    %c0_3 = arith.constant 0 : index
    %4 = vector.load %arg3[%c0_2, %c0_3] : memref<128x512xbf16, #tpu.memory_space<vmem>>, vector<128x512xbf16>
    %cst = arith.constant dense<0.000000e+00> : vector<16x512xf32>
    %5 = tpu.matmul %3, %4, %cst {dimension_numbers = #tpu.dot_dimension_numbers<[1], [0], [0], [1], [0, 0, 1, 1], [], []>} : vector<16x128xbf16>, vector<128x512xbf16>, vector<16x512xf32> -> vector<16x512xf32>
    %6 = vector.extract_strided_slice %5 {offsets = [0, 0], sizes = [16, 256], strides = [1, 1]} : vector<16x512xf32> to vector<16x256xf32>
    %7 = vector.extract_strided_slice %5 {offsets = [0, 256], sizes = [16, 256], strides = [1, 1]} : vector<16x512xf32> to vector<16x256xf32>
    %cst_4 = arith.constant 0.000000e+00 : f32
    %8 = vector.broadcast %cst_4 : f32 to vector<16x256xf32>
    %9 = arith.subf %8, %6 : vector<16x256xf32>
    %10 = math.exp %9 : vector<16x256xf32>
    %cst_5 = arith.constant 1.000000e+00 : f32
    %11 = vector.broadcast %cst_5 : f32 to vector<16x256xf32>
    %12 = arith.addf %11, %10 : vector<16x256xf32>
    %13 = tpu.reciprocal %12 {approx = true} : vector<16x256xf32> -> vector<16x256xf32>
    %14 = arith.mulf %6, %13 : vector<16x256xf32>
    %15 = arith.mulf %7, %14 : vector<16x256xf32>
    %16 = arith.truncf %15 : vector<16x256xf32> to vector<16x256xbf16>
    %c0_6 = arith.constant 0 : index
    %c0_7 = arith.constant 0 : index
    %17 = vector.load %arg6[%c0_6, %c0_7] : memref<16x128xf32, #tpu.memory_space<vmem>>, vector<16x128xf32>
    %c0_8 = arith.constant 0 : index
    %c0_9 = arith.constant 0 : index
    %18 = vector.load %arg4[%c0_8, %c0_9] : memref<256x128xbf16, #tpu.memory_space<vmem>>, vector<256x128xbf16>
    %cst_10 = arith.constant dense<0.000000e+00> : vector<16x128xf32>
    %19 = tpu.matmul %16, %18, %cst_10 {dimension_numbers = #tpu.dot_dimension_numbers<[1], [0], [0], [1], [0, 0, 1, 1], [], []>} : vector<16x256xbf16>, vector<256x128xbf16>, vector<16x128xf32> -> vector<16x128xf32>
    %20 = arith.addf %17, %19 : vector<16x128xf32>
    %c0_11 = arith.constant 0 : index
    %c0_12 = arith.constant 0 : index
    %21 = vector.load %arg6[%c0_11, %c0_12] : memref<16x128xf32, #tpu.memory_space<vmem>>, vector<16x128xf32>
    tpu.vector_store %arg6[%c0_11, %c0_12], %20 {strides = array<i32>} : memref<16x128xf32, #tpu.memory_space<vmem>>, vector<16x128xf32>,
    %c0_i32_13 = arith.constant 0 : i32
    %22 = arith.cmpi eq, %arg1, %c0_i32_13 : i32
    %23 = arith.extui %22 : i1 to i32
    %c0_i32_14 = arith.constant 0 : i32
    %24 = arith.cmpi ne, %23, %c0_i32_14 : i32
    scf.if %24 {
      %c0_15 = arith.constant 0 : index
      %c0_16 = arith.constant 0 : index
      %25 = vector.load %arg6[%c0_15, %c0_16] : memref<16x128xf32, #tpu.memory_space<vmem>>, vector<16x128xf32>
      %c0_17 = arith.constant 0 : index
      %c0_18 = arith.constant 0 : index
      %26 = vector.load %arg5[%c0_17, %c0_18] : memref<16x128xf32, #tpu.memory_space<vmem>>, vector<16x128xf32>
      tpu.vector_store %arg5[%c0_17, %c0_18], %25 {strides = array<i32>} : memref<16x128xf32, #tpu.memory_space<vmem>>, vector<16x128xf32>,
    } else {
    }
    return
  }
  func.func @transform_0(%arg0: i32, %arg1: i32) -> (i32, i32) {
    %c0_i32 = arith.constant 0 : i32
    %c0_i32_0 = arith.constant 0 : i32
    return %arg0, %c0_i32 : i32, i32
  }
  func.func @transform_1(%arg0: i32, %arg1: i32) -> (i32, i32) {
    %c0_i32 = arith.constant 0 : i32
    %c0_i32_0 = arith.constant 0 : i32
    return %c0_i32, %arg1 : i32, i32
  }
  func.func @transform_2(%arg0: i32, %arg1: i32) -> (i32, i32) {
    %c0_i32 = arith.constant 0 : i32
    %c0_i32_0 = arith.constant 0 : i32
    return %arg1, %c0_i32 : i32, i32
  }
  func.func @transform_3(%arg0: i32, %arg1: i32) -> (i32, i32) {
    %c0_i32 = arith.constant 0 : i32
    %c0_i32_0 = arith.constant 0 : i32
    return %arg0, %c0_i32 : i32, i32
  }
}

</mosaic_0001>

<llo_original>
// kernel: tpu_custom_call.1
$region0: #{tpu_custom_call.1}
  #allocation0 [shape = 'u32[]', space=smem, size = 0x4, offset = 0x4, fixed_abs, tag = 'smem constant byte address 0x4 - core index']
  #allocation1 [shape = 'u32[144,128]{1,0:T(1,128)}', space=vmem, size = 0x12000, scoped, tag = 'internal scratch']
  #allocation2 [shape = 'f32[16,128]{1,0:T(8,128)}', space=vmem, size = 0x2000, scoped, tag = 'scratch operand']
  %s0 = inlined_call_operand.hbm [shape: bf16[16,128], index: 0, kind: input, shape index: {}]
  %s1 = inlined_call_operand.hbm [shape: bf16[128,512], index: 1, kind: input, shape index: {}]
  %s2 = inlined_call_operand.hbm [shape: bf16[256,128], index: 2, kind: input, shape index: {}]
  %s3 = inlined_call_operand.hbm [shape: f32[16,128], index: 3, kind: output, shape index: {}]
  %s4 = sld [smem:[#allocation0]]
  $region42: #{tpu_custom_call.1} parent=0
    _
  %s6 = ssub.s32 1, %s4
  %s7 = scalar_select 0, %s6, %s4
  $region1: #{tpu_custom_call.1} parent=0
    #allocation3 [shape = 'u8[4096]{0}', space=vmem, size = 0x1000, scoped, tag = 'input window, operand 0, single buffered']
    #allocation4 [shape = 's32[1]{0}', space=sflag, size = 0x4, scoped, tag = 'scoped memory for tpu_custom_call.1']
    #allocation5 [shape = 's32[1]{0}', space=sflag, size = 0x4, scoped, tag = 'scoped memory for tpu_custom_call.1']
    #allocation6 [shape = 'u8[131072]{0}', space=vmem, size = 0x20000, scoped, tag = 'input window, operand 1, single buffered']
    #allocation7 [shape = 's32[1]{0}', space=sflag, size = 0x4, scoped, tag = 'scoped memory for tpu_custom_call.1']
    #allocation8 [shape = 'u8[65536]{0}', space=vmem, size = 0x10000, scoped, tag = 'input window, operand 2, single buffered']
    #allocation9 [shape = 'u8[8192]{0}', space=vmem, size = 0x2000, scoped, tag = 'output window, operand 0, single buffered']
    %8 = vsyncpa [#allocation4], 0
    %9 = vsyncpa [#allocation7], 0
    %10 = vsyncpa [#allocation5], 0
    // Predicated region
    $region2: #{tpu_custom_call.1} parent=1 // pred_check
      _
    $region3: #{tpu_custom_call.1} parent=1 // pred_check_branch
      %12 = sbr.rel (0) target = $region5
    $region4: #{tpu_custom_call.1} parent=1 // pred_region
      %s14 = ssub.s32 128, 128
      %15 = vsyncadd [#allocation4], %s14
      %s16 = sshll.u32 [#allocation3], 4
      %s17 = int_to_ptr.vmem [resolvable:$true] %s16
      %22 = dma.hbm_to_vmem [thread:$0]  %s0, 128, %s17, [#allocation4], 64, 64, 4
    $region5: #{tpu_custom_call.1} parent=1 // pred_fallthru
      _
    // Predicated region
    $region6: #{tpu_custom_call.1} parent=1 // pred_check
      _
    $region7: #{tpu_custom_call.1} parent=1 // pred_check_branch
      %24 = sbr.rel (0) target = $region9
    $region8: #{tpu_custom_call.1} parent=1 // pred_region
      %s26 = ssub.s32 4096, 4096
      %27 = vsyncadd [#allocation7], %s26
      %s28 = sshll.u32 [#allocation6], 4
      %s29 = int_to_ptr.vmem [resolvable:$true] %s28
      %34 = dma.hbm_to_vmem [thread:$0]  %s1, 4096, %s29, [#allocation7], 256, 256, 16
    $region9: #{tpu_custom_call.1} parent=1 // pred_fallthru
      _
    // Predicated region
    $region10: #{tpu_custom_call.1} parent=1 // pred_check
      _
    $region11: #{tpu_custom_call.1} parent=1 // pred_check_branch
      %36 = sbr.rel (0) target = $region13
    $region12: #{tpu_custom_call.1} parent=1 // pred_region
      %s38 = ssub.s32 2048, 2048
      %39 = vsyncadd [#allocation7], %s38
      %s40 = sshll.u32 [#allocation8], 4
      %s41 = int_to_ptr.vmem [resolvable:$true] %s40
      %46 = dma.hbm_to_vmem [thread:$0]  %s2, 2048, %s41, [#allocation7], 64, 64, 4
    $region13: #{tpu_custom_call.1} parent=1 // pred_fallthru
      _
    // Predicated region
    $region14: #{tpu_custom_call.1} parent=1 // pred_check
      _
    $region15: #{tpu_custom_call.1} parent=1 // pred_check_branch
      %48 = sbr.rel (0) target = $region17
    $region16: #{tpu_custom_call.1} parent=1 // pred_region
      %49 = dma.done [#allocation4], 128
    $region17: #{tpu_custom_call.1} parent=1 // pred_fallthru
      _
    // Predicated region
    $region18: #{tpu_custom_call.1} parent=1 // pred_check
      _
    $region19: #{tpu_custom_call.1} parent=1 // pred_check_branch
      %51 = sbr.rel (0) target = $region21
    $region20: #{tpu_custom_call.1} parent=1 // pred_region
      %52 = dma.done [#allocation7], 4096
    $region21: #{tpu_custom_call.1} parent=1 // pred_fallthru
      _
    // Predicated region
    $region22: #{tpu_custom_call.1} parent=1 // pred_check
      _
    $region23: #{tpu_custom_call.1} parent=1 // pred_check_branch
      %54 = sbr.rel (0) target = $region25
    $region24: #{tpu_custom_call.1} parent=1 // pred_region
      %55 = dma.done [#allocation7], 2048
    $region25: #{tpu_custom_call.1} parent=1 // pred_fallthru
      _
    %p57 = scmp.eq.s32.totalorder 0, 0
    // Predicated region
    $region26: #{tpu_custom_call.1} parent=1 // pred_check
      %p58 = pneg %p57
    $region27: #{tpu_custom_call.1} parent=1 // pred_check_branch
      %60 = sbr.rel (%p58) target = $region29
    $region28: #{tpu_custom_call.1} parent=1 // pred_region
      %61 = vst [vmem:[#allocation2] sm:$0xff] 0.0
      %62 = vst [vmem:[#allocation2 + $0x8] sm:$0xff] 0.0
    $region29: #{tpu_custom_call.1} parent=1 // pred_fallthru
      _
    %v63 = vld [vmem:[#allocation3] sm:$0xf]
    %v64 = vld [vmem:[#allocation3 + $0x4] sm:$0xf]
    %v65 = vld [vmem:[#allocation6] sm:$0xff]
    %v66 = vld [vmem:[#allocation6 + $0x8] sm:$0xff]
    %v67 = vld [vmem:[#allocation6 + $0x10] sm:$0xff]
    %v68 = vld [vmem:[#allocation6 + $0x18] sm:$0xff]
    %v69 = vld [vmem:[#allocation6 + $0x20] sm:$0xff]
    %v70 = vld [vmem:[#allocation6 + $0x28] sm:$0xff]
    %v71 = vld [vmem:[#allocation6 + $0x30] sm:$0xff]
    %v72 = vld [vmem:[#allocation6 + $0x38] sm:$0xff]
    %v73 = vld [vmem:[#allocation6 + $0x40] sm:$0xff]
    %v74 = vld [vmem:[#allocation6 + $0x48] sm:$0xff]
    %v75 = vld [vmem:[#allocation6 + $0x50] sm:$0xff]
    %v76 = vld [vmem:[#allocation6 + $0x58] sm:$0xff]
    %v77 = vld [vmem:[#allocation6 + $0x60] sm:$0xff]
    %v78 = vld [vmem:[#allocation6 + $0x68] sm:$0xff]
    %v79 = vld [vmem:[#allocation6 + $0x70] sm:$0xff]
    %v80 = vld [vmem:[#allocation6 + $0x78] sm:$0xff]
    %v81 = vld [vmem:[#allocation6 + $0x80] sm:$0xff]
    %v82 = vld [vmem:[#allocation6 + $0x88] sm:$0xff]
    %v83 = vld [vmem:[#allocation6 + $0x90] sm:$0xff]
    %v84 = vld [vmem:[#allocation6 + $0x98] sm:$0xff]
    %v85 = vld [vmem:[#allocation6 + $0xa0] sm:$0xff]
    %v86 = vld [vmem:[#allocation6 + $0xa8] sm:$0xff]
    %v87 = vld [vmem:[#allocation6 + $0xb0] sm:$0xff]
    %v88 = vld [vmem:[#allocation6 + $0xb8] sm:$0xff]
    %v89 = vld [vmem:[#allocation6 + $0xc0] sm:$0xff]
    %v90 = vld [vmem:[#allocation6 + $0xc8] sm:$0xff]
    %v91 = vld [vmem:[#allocation6 + $0xd0] sm:$0xff]
    %v92 = vld [vmem:[#allocation6 + $0xd8] sm:$0xff]
    %v93 = vld [vmem:[#allocation6 + $0xe0] sm:$0xff]
    %v94 = vld [vmem:[#allocation6 + $0xe8] sm:$0xff]
    %v95 = vld [vmem:[#allocation6 + $0xf0] sm:$0xff]
    %v96 = vld [vmem:[#allocation6 + $0xf8] sm:$0xff]
    %v99 = vunpack.c.l.b16 %v63
    %v100 = vunpack.c.l.b16 %v64
    %v101 = vpack.c.b16 %v100, %v99
    %v135 = vunpack.c.l.b16 %v65
    %v136 = vunpack.c.h.b16 %v65
    %v137 = vunpack.c.l.b16 %v66
    %v138 = vunpack.c.h.b16 %v66
    %v139 = vunpack.c.l.b16 %v67
    %v140 = vunpack.c.h.b16 %v67
    %v141 = vunpack.c.l.b16 %v68
    %v142 = vunpack.c.h.b16 %v68
    %v143 = vunpack.c.l.b16 %v69
    %v144 = vunpack.c.h.b16 %v69
    %v145 = vunpack.c.l.b16 %v70
    %v146 = vunpack.c.h.b16 %v70
    %v147 = vunpack.c.l.b16 %v71
    %v148 = vunpack.c.h.b16 %v71
    %v149 = vunpack.c.l.b16 %v72
    %v150 = vunpack.c.h.b16 %v72
    %v151 = vunpack.c.l.b16 %v73
    %v152 = vunpack.c.h.b16 %v73
    %v153 = vunpack.c.l.b16 %v74
    %v154 = vunpack.c.h.b16 %v74
    %v155 = vunpack.c.l.b16 %v75
    %v156 = vunpack.c.h.b16 %v75
    %v157 = vunpack.c.l.b16 %v76
    %v158 = vunpack.c.h.b16 %v76
    %v159 = vunpack.c.l.b16 %v77
    %v160 = vunpack.c.h.b16 %v77
    %v161 = vunpack.c.l.b16 %v78
    %v162 = vunpack.c.h.b16 %v78
    %v163 = vunpack.c.l.b16 %v79
    %v164 = vunpack.c.h.b16 %v79
    %v165 = vunpack.c.l.b16 %v80
    %v166 = vunpack.c.h.b16 %v80
    %v167 = vunpack.c.l.b16 %v81
    %v168 = vunpack.c.h.b16 %v81
    %v169 = vunpack.c.l.b16 %v82
    %v170 = vunpack.c.h.b16 %v82
    %v171 = vunpack.c.l.b16 %v83
    %v172 = vunpack.c.h.b16 %v83
    %v173 = vunpack.c.l.b16 %v84
    %v174 = vunpack.c.h.b16 %v84
    %v175 = vunpack.c.l.b16 %v85
    %v176 = vunpack.c.h.b16 %v85
    %v177 = vunpack.c.l.b16 %v86
    %v178 = vunpack.c.h.b16 %v86
    %v179 = vunpack.c.l.b16 %v87
    %v180 = vunpack.c.h.b16 %v87
    %v181 = vunpack.c.l.b16 %v88
    %v182 = vunpack.c.h.b16 %v88
    %v183 = vunpack.c.l.b16 %v89
    %v184 = vunpack.c.h.b16 %v89
    %v185 = vunpack.c.l.b16 %v90
    %v186 = vunpack.c.h.b16 %v90
    %v187 = vunpack.c.l.b16 %v91
    %v188 = vunpack.c.h.b16 %v91
    %v189 = vunpack.c.l.b16 %v92
    %v190 = vunpack.c.h.b16 %v92
    %v191 = vunpack.c.l.b16 %v93
    %v192 = vunpack.c.h.b16 %v93
    %v193 = vunpack.c.l.b16 %v94
    %v194 = vunpack.c.h.b16 %v94
    %v195 = vunpack.c.l.b16 %v95
    %v196 = vunpack.c.h.b16 %v95
    %v197 = vunpack.c.l.b16 %v96
    %v198 = vunpack.c.h.b16 %v96
    %v199 = vpack.c.b16 %v139, %v135
    %v200 = vpack.c.b16 %v140, %v136
    %v201 = vpack.c.b16 %v141, %v137
    %v202 = vpack.c.b16 %v142, %v138
    %v203 = vpack.c.b16 %v147, %v143
    %v204 = vpack.c.b16 %v148, %v144
    %v205 = vpack.c.b16 %v149, %v145
    %v206 = vpack.c.b16 %v150, %v146
    %v207 = vpack.c.b16 %v155, %v151
    %v208 = vpack.c.b16 %v156, %v152
    %v209 = vpack.c.b16 %v157, %v153
    %v210 = vpack.c.b16 %v158, %v154
    %v211 = vpack.c.b16 %v163, %v159
    %v212 = vpack.c.b16 %v164, %v160
    %v213 = vpack.c.b16 %v165, %v161
    %v214 = vpack.c.b16 %v166, %v162
    %v215 = vpack.c.b16 %v171, %v167
    %v216 = vpack.c.b16 %v172, %v168
    %v217 = vpack.c.b16 %v173, %v169
    %v218 = vpack.c.b16 %v174, %v170
    %v219 = vpack.c.b16 %v179, %v175
    %v220 = vpack.c.b16 %v180, %v176
    %v221 = vpack.c.b16 %v181, %v177
    %v222 = vpack.c.b16 %v182, %v178
    %v223 = vpack.c.b16 %v187, %v183
    %v224 = vpack.c.b16 %v188, %v184
    %v225 = vpack.c.b16 %v189, %v185
    %v226 = vpack.c.b16 %v190, %v186
    %v227 = vpack.c.b16 %v195, %v191
    %v228 = vpack.c.b16 %v196, %v192
    %v229 = vpack.c.b16 %v197, %v193
    %v230 = vpack.c.b16 %v198, %v194
    %263 = vmatprep.subr.bf16.mxu0 %v200
    %264 = vmatpush1.bf16.msra.mxu0 %v199
    %265 = vmatprep.subr.bf16.mxu0 %v204
    %266 = vmatpush1.bf16.msra.mxu0 %v203
    %267 = vmatprep.subr.bf16.mxu0 %v208
    %268 = vmatpush1.bf16.msra.mxu0 %v207
    %269 = vmatprep.subr.bf16.mxu0 %v212
    %270 = vmatpush1.bf16.msra.mxu0 %v211
    %271 = vmatprep.subr.bf16.mxu0 %v216
    %272 = vmatpush1.bf16.msra.mxu0 %v215
    %273 = vmatprep.subr.bf16.mxu0 %v220
    %274 = vmatpush1.bf16.msra.mxu0 %v219
    %275 = vmatprep.subr.bf16.mxu0 %v224
    %276 = vmatpush1.bf16.msra.mxu0 %v223
    %277 = vmatprep.subr.bf16.mxu0 %v228
    %278 = vmatpush1.bf16.msra.mxu0 %v227
    %279 = vmatprep.subr.bf16.mxu0 0
    %280 = vmatpush1.bf16.msra.mxu0 0
    %281 = vmatprep.subr.bf16.mxu0 0
    %282 = vmatpush1.bf16.msra.mxu0 0
    %283 = vmatprep.subr.bf16.mxu0 0
    %284 = vmatpush1.bf16.msra.mxu0 0
    %285 = vmatprep.subr.bf16.mxu0 0
    %286 = vmatpush1.bf16.msra.mxu0 0
    %287 = vmatprep.subr.bf16.mxu0 0
    %288 = vmatpush1.bf16.msra.mxu0 0
    %289 = vmatprep.subr.bf16.mxu0 0
    %290 = vmatpush1.bf16.msra.mxu0 0
    %291 = vmatprep.subr.bf16.mxu0 0
    %292 = vmatpush1.bf16.msra.mxu0 0
    %293 = vmatprep.subr.bf16.mxu0 0
    %294 = vmatpush1.bf16.msra.mxu0 0
    %295 = vmatprep.mubr.bf16.mxu0 0
    %296 = vmatmul.mubr.bf16.gmra.mrb[0].mxu0 %v101
    %v297 = vpop.f32.mrb[0].mxu0
    %v298 = vadd.f32 0.0, %v297
    %v299 = vpop.f32.mrb[0].mxu0
    %v300 = vadd.f32 0.0, %v299
    %v301 = vpop.f32.mrb[0].mxu0
    %v302 = vadd.f32 0.0, %v301
    %v303 = vpop.f32.mrb[0].mxu0
    %v304 = vadd.f32 0.0, %v303
    %305 = vdwg.mxu0
    %306 = vmatprep.subr.bf16.mxu0 %v202
    %307 = vmatpush1.bf16.msra.mxu0 %v201
    %308 = vmatprep.subr.bf16.mxu0 %v206
    %309 = vmatpush1.bf16.msra.mxu0 %v205
    %310 = vmatprep.subr.bf16.mxu0 %v210
    %311 = vmatpush1.bf16.msra.mxu0 %v209
    %312 = vmatprep.subr.bf16.mxu0 %v214
    %313 = vmatpush1.bf16.msra.mxu0 %v213
    %314 = vmatprep.subr.bf16.mxu0 %v218
    %315 = vmatpush1.bf16.msra.mxu0 %v217
    %316 = vmatprep.subr.bf16.mxu0 %v222
    %317 = vmatpush1.bf16.msra.mxu0 %v221
    %318 = vmatprep.subr.bf16.mxu0 %v226
    %319 = vmatpush1.bf16.msra.mxu0 %v225
    %320 = vmatprep.subr.bf16.mxu0 %v230
    %321 = vmatpush1.bf16.msra.mxu0 %v229
    %322 = vmatprep.subr.bf16.mxu0 0
    %323 = vmatpush1.bf16.msra.mxu0 0
    %324 = vmatprep.subr.bf16.mxu0 0
    %325 = vmatpush1.bf16.msra.mxu0 0
    %326 = vmatprep.subr.bf16.mxu0 0
    %327 = vmatpush1.bf16.msra.mxu0 0
    %328 = vmatprep.subr.bf16.mxu0 0
    %329 = vmatpush1.bf16.msra.mxu0 0
    %330 = vmatprep.subr.bf16.mxu0 0
    %331 = vmatpush1.bf16.msra.mxu0 0
    %332 = vmatprep.subr.bf16.mxu0 0
    %333 = vmatpush1.bf16.msra.mxu0 0
    %334 = vmatprep.subr.bf16.mxu0 0
    %335 = vmatpush1.bf16.msra.mxu0 0
    %336 = vmatprep.subr.bf16.mxu0 0
    %337 = vmatpush1.bf16.msra.mxu0 0
    %338 = vmatprep.mubr.bf16.mxu0 0
    %339 = vmatmul.mubr.bf16.gmra.mrb[0].mxu0 %v101
    %v340 = vpop.f32.mrb[0].mxu0
    %v341 = vadd.f32 0.0, %v340
    %v342 = vpop.f32.mrb[0].mxu0
    %v343 = vadd.f32 0.0, %v342
    %v344 = vpop.f32.mrb[0].mxu0
    %v345 = vadd.f32 0.0, %v344
    %v346 = vpop.f32.mrb[0].mxu0
    %v347 = vadd.f32 0.0, %v346
    %348 = vdwg.mxu0
    %v349 = vsub.f32 0.0, %v298
    %v350 = vsub.f32 0.0, %v300
    %v351 = vsub.f32 0.0, %v302
    %v352 = vsub.f32 0.0, %v304
    %v353 = vmul.f32 %v349, 1.442695
    %v354 = vpow.pop %v353
    %v355 = vmul.f32 %v350, 1.442695
    %v356 = vpow.pop %v355
    %v357 = vmul.f32 %v351, 1.442695
    %v358 = vpow.pop %v357
    %v359 = vmul.f32 %v352, 1.442695
    %v360 = vpow.pop %v359
    %v361 = vadd.f32 %v354, 1.0
    %v362 = vadd.f32 %v356, 1.0
    %v363 = vadd.f32 %v358, 1.0
    %v364 = vadd.f32 %v360, 1.0
    %v365 = vrcp.pop %v361
    %v366 = vrcp.pop %v362
    %v367 = vrcp.pop %v363
    %v368 = vrcp.pop %v364
    %v369 = vmul.f32 %v298, %v365
    %v370 = vmul.f32 %v300, %v366
    %v371 = vmul.f32 %v302, %v367
    %v372 = vmul.f32 %v304, %v368
    %v373 = vmul.f32 %v341, %v369
    %v374 = vmul.f32 %v343, %v370
    %v375 = vmul.f32 %v345, %v371
    %v376 = vmul.f32 %v347, %v372
    %v377 = vpack.c.bf16 %v375, %v373
    %v378 = vpack.c.bf16 %v376, %v374
    %v379 = vld [vmem:[#allocation2] sm:$0xff]
    %v380 = vld [vmem:[#allocation2 + $0x8] sm:$0xff]
    %v381 = vld [vmem:[#allocation8] sm:$0xf]
    %v382 = vld [vmem:[#allocation8 + $0x4] sm:$0xf]
    %v383 = vld [vmem:[#allocation8 + $0x8] sm:$0xf]
    %v384 = vld [vmem:[#allocation8 + $0xc] sm:$0xf]
    %v385 = vld [vmem:[#allocation8 + $0x10] sm:$0xf]
    %v386 = vld [vmem:[#allocation8 + $0x14] sm:$0xf]
    %v387 = vld [vmem:[#allocation8 + $0x18] sm:$0xf]
    %v388 = vld [vmem:[#allocation8 + $0x1c] sm:$0xf]
    %v389 = vld [vmem:[#allocation8 + $0x20] sm:$0xf]
    %v390 = vld [vmem:[#allocation8 + $0x24] sm:$0xf]
    %v391 = vld [vmem:[#allocation8 + $0x28] sm:$0xf]
    %v392 = vld [vmem:[#allocation8 + $0x2c] sm:$0xf]
    %v393 = vld [vmem:[#allocation8 + $0x30] sm:$0xf]
    %v394 = vld [vmem:[#allocation8 + $0x34] sm:$0xf]
    %v395 = vld [vmem:[#allocation8 + $0x38] sm:$0xf]
    %v396 = vld [vmem:[#allocation8 + $0x3c] sm:$0xf]
    %v397 = vld [vmem:[#allocation8 + $0x40] sm:$0xf]
    %v398 = vld [vmem:[#allocation8 + $0x44] sm:$0xf]
    %v399 = vld [vmem:[#allocation8 + $0x48] sm:$0xf]
    %v400 = vld [vmem:[#allocation8 + $0x4c] sm:$0xf]
    %v401 = vld [vmem:[#allocation8 + $0x50] sm:$0xf]
    %v402 = vld [vmem:[#allocation8 + $0x54] sm:$0xf]
    %v403 = vld [vmem:[#allocation8 + $0x58] sm:$0xf]
    %v404 = vld [vmem:[#allocation8 + $0x5c] sm:$0xf]
    %v405 = vld [vmem:[#allocation8 + $0x60] sm:$0xf]
    %v406 = vld [vmem:[#allocation8 + $0x64] sm:$0xf]
    %v407 = vld [vmem:[#allocation8 + $0x68] sm:$0xf]
    %v408 = vld [vmem:[#allocation8 + $0x6c] sm:$0xf]
    %v409 = vld [vmem:[#allocation8 + $0x70] sm:$0xf]
    %v410 = vld [vmem:[#allocation8 + $0x74] sm:$0xf]
    %v411 = vld [vmem:[#allocation8 + $0x78] sm:$0xf]
    %v412 = vld [vmem:[#allocation8 + $0x7c] sm:$0xf]
    %v445 = vunpack.c.l.b16 %v381
    %v446 = vunpack.c.l.b16 %v382
    %v447 = vunpack.c.l.b16 %v383
    %v448 = vunpack.c.l.b16 %v384
    %v449 = vunpack.c.l.b16 %v385
    %v450 = vunpack.c.l.b16 %v386
    %v451 = vunpack.c.l.b16 %v387
    %v452 = vunpack.c.l.b16 %v388
    %v453 = vunpack.c.l.b16 %v389
    %v454 = vunpack.c.l.b16 %v390
    %v455 = vunpack.c.l.b16 %v391
    %v456 = vunpack.c.l.b16 %v392
    %v457 = vunpack.c.l.b16 %v393
    %v458 = vunpack.c.l.b16 %v394
    %v459 = vunpack.c.l.b16 %v395
    %v460 = vunpack.c.l.b16 %v396
    %v461 = vunpack.c.l.b16 %v397
    %v462 = vunpack.c.l.b16 %v398
    %v463 = vunpack.c.l.b16 %v399
    %v464 = vunpack.c.l.b16 %v400
    %v465 = vunpack.c.l.b16 %v401
    %v466 = vunpack.c.l.b16 %v402
    %v467 = vunpack.c.l.b16 %v403
    %v468 = vunpack.c.l.b16 %v404
    %v469 = vunpack.c.l.b16 %v405
    %v470 = vunpack.c.l.b16 %v406
    %v471 = vunpack.c.l.b16 %v407
    %v472 = vunpack.c.l.b16 %v408
    %v473 = vunpack.c.l.b16 %v409
    %v474 = vunpack.c.l.b16 %v410
    %v475 = vunpack.c.l.b16 %v411
    %v476 = vunpack.c.l.b16 %v412
    %v477 = vpack.c.b16 %v446, %v445
    %v478 = vpack.c.b16 %v448, %v447
    %v479 = vpack.c.b16 %v450, %v449
    %v480 = vpack.c.b16 %v452, %v451
    %v481 = vpack.c.b16 %v454, %v453
    %v482 = vpack.c.b16 %v456, %v455
    %v483 = vpack.c.b16 %v458, %v457
    %v484 = vpack.c.b16 %v460, %v459
    %v485 = vpack.c.b16 %v462, %v461
    %v486 = vpack.c.b16 %v464, %v463
    %v487 = vpack.c.b16 %v466, %v465
    %v488 = vpack.c.b16 %v468, %v467
    %v489 = vpack.c.b16 %v470, %v469
    %v490 = vpack.c.b16 %v472, %v471
    %v491 = vpack.c.b16 %v474, %v473
    %v492 = vpack.c.b16 %v476, %v475
    %509 = vmatprep.subr.bf16.mxu0 0
    %510 = vmatpush1.bf16.msra.mxu0 %v477
    %511 = vmatprep.subr.bf16.mxu0 0
    %512 = vmatpush1.bf16.msra.mxu0 %v478
    %513 = vmatprep.subr.bf16.mxu0 0
    %514 = vmatpush1.bf16.msra.mxu0 %v479
    %515 = vmatprep.subr.bf16.mxu0 0
    %516 = vmatpush1.bf16.msra.mxu0 %v480
    %517 = vmatprep.subr.bf16.mxu0 0
    %518 = vmatpush1.bf16.msra.mxu0 %v481
    %519 = vmatprep.subr.bf16.mxu0 0
    %520 = vmatpush1.bf16.msra.mxu0 %v482
    %521 = vmatprep.subr.bf16.mxu0 0
    %522 = vmatpush1.bf16.msra.mxu0 %v483
    %523 = vmatprep.subr.bf16.mxu0 0
    %524 = vmatpush1.bf16.msra.mxu0 %v484
    %525 = vmatprep.subr.bf16.mxu0 0
    %526 = vmatpush1.bf16.msra.mxu0 %v485
    %527 = vmatprep.subr.bf16.mxu0 0
    %528 = vmatpush1.bf16.msra.mxu0 %v486
    %529 = vmatprep.subr.bf16.mxu0 0
    %530 = vmatpush1.bf16.msra.mxu0 %v487
    %531 = vmatprep.subr.bf16.mxu0 0
    %532 = vmatpush1.bf16.msra.mxu0 %v488
    %533 = vmatprep.subr.bf16.mxu0 0
    %534 = vmatpush1.bf16.msra.mxu0 %v489
    %535 = vmatprep.subr.bf16.mxu0 0
    %536 = vmatpush1.bf16.msra.mxu0 %v490
    %537 = vmatprep.subr.bf16.mxu0 0
    %538 = vmatpush1.bf16.msra.mxu0 %v491
    %539 = vmatprep.subr.bf16.mxu0 0
    %540 = vmatpush1.bf16.msra.mxu0 %v492
    %541 = vmatprep.mubr.bf16.mxu0 %v378
    %542 = vmatmul.mubr.bf16.gmra.mrb[0].mxu0 %v377
    %v543 = vpop.f32.mrb[0].mxu0
    %v544 = vadd.f32 0.0, %v543
    %v545 = vpop.f32.mrb[0].mxu0
    %v546 = vpop.f32.mrb[0].mxu0
    %v547 = vadd.f32 0.0, %v546
    %v548 = vpop.f32.mrb[0].mxu0
    %549 = vdwg.mxu0
    %v550 = vadd.f32 %v379, %v544
    %v551 = vadd.f32 %v380, %v547
    %552 = vst [vmem:[#allocation2] sm:$0xff] %v550
    %553 = vst [vmem:[#allocation2 + $0x8] sm:$0xff] %v551
    // Predicated region
    $region30: #{tpu_custom_call.1} parent=1 // pred_check
      %p554 = pneg %p57
    $region31: #{tpu_custom_call.1} parent=1 // pred_check_branch
      %556 = sbr.rel (%p554) target = $region33
    $region32: #{tpu_custom_call.1} parent=1 // pred_region
      %v557 = vld [vmem:[#allocation2] sm:$0xff]
      %v558 = vld [vmem:[#allocation2 + $0x8] sm:$0xff]
      %559 = vst [vmem:[#allocation9] sm:$0xff] %v557
      %560 = vst [vmem:[#allocation9 + $0x8] sm:$0xff] %v558
    $region33: #{tpu_custom_call.1} parent=1 // pred_fallthru
      _
    // Predicated region
    $region34: #{tpu_custom_call.1} parent=1 // pred_check
      _
    $region35: #{tpu_custom_call.1} parent=1 // pred_check_branch
      %562 = sbr.rel (0) target = $region37
    $region36: #{tpu_custom_call.1} parent=1 // pred_region
      %s564 = ssub.s32 256, 256
      %565 = vsyncadd [#allocation5], %s564
      %s566 = sshll.u32 [#allocation9], 4
      %s567 = int_to_ptr.vmem [resolvable:$true] %s566
      %572 = dma.vmem_to_hbm [thread:$0]  %s567, 256, %s3, [#allocation5], 128, 128, 8
    $region37: #{tpu_custom_call.1} parent=1 // pred_fallthru
      _
    // Predicated region
    $region38: #{tpu_custom_call.1} parent=1 // pred_check
      _
    $region39: #{tpu_custom_call.1} parent=1 // pred_check_branch
      %574 = sbr.rel (0) target = $region41
    $region40: #{tpu_custom_call.1} parent=1 // pred_region
      %575 = dma.done [#allocation5], 256
    $region41: #{tpu_custom_call.1} parent=1 // pred_fallthru
      _
    %576 = vsyncpa [#allocation4], 1
    %577 = vsyncpa [#allocation7], 1
    %578 = vsyncpa [#allocation5], 1

</llo_original>
